<compile_context>
chip_gen: v5e
topology: v5e:2x2
jax: 0.10.0
libtpu: 0.0.40
codegen_flags: <defaults>
</compile_context>

<pallas_src>
import functools

import jax
import jax.numpy as jnp
from jax.experimental import pallas as pl
from jax.experimental.pallas import tpu as pltpu


# ----------------------------------------------------------------------------
# Helpers
# ----------------------------------------------------------------------------
def _round_up(n, m):
    return ((n + m - 1) // m) * m


def _resident_spec(arr):
    """Full-array, grid-invariant block (weights stay VMEM-resident)."""
    n = arr.ndim
    # TODO(synk): for production-size nf on v7x, try pipeline_mode=pl.Buffered(1)
    # here (verify Mosaic doesn't already detect the invariant window); at these
    # sizes the default double-buffered footprint (<1 MiB) is irrelevant.
    return pl.BlockSpec(arr.shape, lambda i: (0,) * n)


def _block_diag2(a, b):
    top = jnp.concatenate([a, jnp.zeros((a.shape[0], b.shape[1]), a.dtype)], axis=1)
    bot = jnp.concatenate([jnp.zeros((b.shape[0], a.shape[1]), b.dtype), b], axis=1)
    return jnp.concatenate([top, bot], axis=0)


# ----------------------------------------------------------------------------
# The single fused kernel
# ----------------------------------------------------------------------------
def _cfview_core_kernel(x_ref, wep_ref, bep_ref, wh_ref, bh_ref,
                        w4r_ref, b4r_ref, w4i_ref, b4i_ref,
                        o1_ref, o2_ref):
    # Collapsed affine chain (to_patch_embedding -> mlp_head -> get_r/get_i),
    # replicated block-diagonally over the F patches: one bf16 MXU dot, f32
    # accumulate + bias.  Output lanes: frequency-interleaved [r_f | i_f].
    h = jnp.dot(x_ref[...], wep_ref[...],
                preferred_element_type=jnp.float32) + bep_ref[...]
    # Both Flatten_MLP_Heads at once: 3x (relu(Wx+b)+x) with block-diagonal,
    # lane-permuted (2nf, 2nf) weights; residual carried in f32, bf16 only at
    # the MXU inputs.
    for layer in range(3):                        # static unroll
        a = jnp.dot(h.astype(jnp.bfloat16), wh_ref[layer],
                    preferred_element_type=jnp.float32) + bh_ref[layer]
        h = jnp.maximum(a, 0.0) + h
    hb = h.astype(jnp.bfloat16)
    # Two separate outputs, consumed directly by the ifft assembly downstream.
    o1_ref[...] = (jnp.dot(hb, w4r_ref[...], preferred_element_type=jnp.float32)
                   + b4r_ref[...]).astype(o1_ref.dtype)
    o2_ref[...] = (jnp.dot(hb, w4i_ref[...], preferred_element_type=jnp.float32)
                   + b4i_ref[...]).astype(o2_ref.dtype)


def fused_cfview_core(x, params):
    """x: (M, F*2P) bf16  ->  (z1f, z2f), each (M, pred_len) f32.  One pallas_call."""
    M, Kin = x.shape
    pred = params["w4r"].shape[1]
    # Single maximal row block (grid is a sequential loop on v5e/v6e); cap at
    # 256 rows so f32 intermediates stay in-register and large-M runs still
    # expose >=2 blocks for dual-TC v7x.  No padding / no output slicing: Pallas
    # masks the ragged last block (no cross-row reductions here).
    tm = min(256, _round_up(M, 8))
    weights = [params["w_embd"], params["b_embd"], params["wh"], params["bh"],
               params["w4r"], params["b4r"], params["w4i"], params["b4i"]]
    z1f, z2f = pl.pallas_call(
        _cfview_core_kernel,
        out_shape=(jax.ShapeDtypeStruct((M, pred), jnp.float32),
                   jax.ShapeDtypeStruct((M, pred), jnp.float32)),
        grid_spec=pl.GridSpec(
            grid=(pl.cdiv(M, tm),),
            in_specs=[pl.BlockSpec((tm, Kin), lambda i: (i, 0))]
                     + [_resident_spec(w) for w in weights],
            out_specs=(pl.BlockSpec((tm, pred), lambda i: (i, 0)),
                       pl.BlockSpec((tm, pred), lambda i: (i, 0))),
        ),
        compiler_params=pltpu.CompilerParams(
            dimension_semantics=("parallel",),
            vmem_limit_bytes=32 * 1024 * 1024,   # safe on v5e/v6e/v7x; weights <1 MiB
        ),
    )(x, *weights)
    return z1f, z2f


# ----------------------------------------------------------------------------
# Parameter construction: raw per-layer f32 params (torch-Linear semantics,
# stored pre-transposed (K, N)), then the offline fusion / permutation in f32
# with a single bf16 cast for the kernel weights.
# ----------------------------------------------------------------------------
def _raw_linear(key, in_f, out_f, scale=0.05):
    kw, kb = jax.random.split(key)
    w = scale * jax.random.normal(kw, (in_f, out_f), jnp.float32)
    b = scale * jax.random.normal(kb, (out_f,), jnp.float32)
    return w, b


def make_cfview_params(key, *, patch_len, cf_dim, d_model, num_frequency, pred_len):
    F_ = num_frequency
    dm2 = 2 * d_model
    nf = dm2 * F_
    keys = jax.random.split(key, 13)

    we, be = _raw_linear(keys[0], 2 * patch_len, cf_dim)
    wm, bm = _raw_linear(keys[1], cf_dim, dm2)
    wr, br = _raw_linear(keys[2], dm2, dm2)
    wi, bi = _raw_linear(keys[3], dm2, dm2)
    h1 = [_raw_linear(keys[4 + l], nf, nf) for l in range(3)]
    h1_4 = _raw_linear(keys[7], nf, pred_len)
    h2 = [_raw_linear(keys[8 + l], nf, nf) for l in range(3)]
    h2_4 = _raw_linear(keys[11], nf, pred_len)
    wirc, birc = _raw_linear(keys[12], 2 * pred_len, pred_len)

    raw = {"we": we, "be": be, "wm": wm, "bm": bm, "wr": wr, "br": br,
           "wi": wi, "bi": bi,
           "h1_w": [w for w, _ in h1], "h1_b": [b for _, b in h1],
           "h1_w4": h1_4[0], "h1_b4": h1_4[1],
           "h2_w": [w for w, _ in h2], "h2_b": [b for _, b in h2],
           "h2_w4": h2_4[0], "h2_b4": h2_4[1],
           "wirc": wirc, "birc": birc}

    # (1) collapse emb -> mlp_head -> [get_r | get_i] (no nonlinearity between
    #     them) into one affine, all in f32.
    w_ri = jnp.concatenate([wr, wi], axis=1)                    # (dm2, 2*dm2)
    b_ri = jnp.concatenate([br, bi], axis=0)                    # (2*dm2,)
    w_ep = we @ wm @ w_ri                                       # (2P, 2*dm2)
    b_ep = (be @ wm + bm) @ w_ri + b_ri                         # (2*dm2,)

    # (2) replicate block-diagonally over the F patches: one dot per (b, c) row,
    #     output lanes interleaved per frequency: [r_0 | i_0 | r_1 | i_1 | ...].
    w_embd = jnp.kron(jnp.eye(F_, dtype=jnp.float32), w_ep)    # (F*2P, 2*nf)
    b_embd = jnp.tile(b_ep, F_)                                 # (2*nf,)

    # (3) lane permutation: interleaved position j holds lane perm[j] of the
    #     canonical [xr | xi] layout the original heads expect.
    j = jnp.arange(2 * nf)
    f_idx = j // (2 * dm2)
    w_idx = j % (2 * dm2)
    perm = jnp.where(w_idx < dm2,
                     f_idx * dm2 + w_idx,
                     nf + f_idx * dm2 + (w_idx - dm2))

    # (4) both heads packed block-diagonally, rows AND cols permuted so the
    #     relu-residual chain runs directly in the interleaved layout.
    wh, bh = [], []
    for l in range(3):
        w_l = _block_diag2(h1[l][0], h2[l][0])                  # (2nf, 2nf)
        b_l = jnp.concatenate([h1[l][1], h2[l][1]], axis=0)     # (2nf,)
        wh.append(w_l[perm][:, perm])
        bh.append(b_l[perm][None, :])
    wh = jnp.stack(wh).astype(jnp.bfloat16)                     # (3, 2nf, 2nf)
    bh = jnp.stack(bh)                                          # (3, 1, 2nf) f32

    # (5) final projections: rows permuted only (outputs stay canonical order).
    zeros = jnp.zeros((nf, pred_len), jnp.float32)
    w4r = jnp.concatenate([h1_4[0], zeros], axis=0)[perm]       # (2nf, pred)
    w4i = jnp.concatenate([zeros, h2_4[0]], axis=0)[perm]       # (2nf, pred)

    params = {
        "w_embd": w_embd.astype(jnp.bfloat16),                  # (F*2P, 2nf) bf16
        "b_embd": b_embd[None, :],                              # (1, 2nf) f32
        "wh": wh, "bh": bh,
        "w4r": w4r.astype(jnp.bfloat16), "b4r": h1_4[1][None, :],
        "w4i": w4i.astype(jnp.bfloat16), "b4i": h2_4[1][None, :],
        "ircom_w": wirc, "ircom_b": birc[None, :],              # tiny; applied in XLA
    }
    return params, raw


# ----------------------------------------------------------------------------
# Forward pass (layers=0, configs.ablation==3: CrossDConv / Shuffler bypassed)
# ----------------------------------------------------------------------------
def cfview_forward(z, params, *, patch_len):
    B, C, L = z.shape
    P = patch_len
    F_ = (L - P) // P + 1
    pred = params["w4r"].shape[1]

    zf = jnp.fft.fft(z, axis=-1)                                    # complex64
    # unfold(dim=-1, size=P, step=P) == reshape of the first F*P samples.
    z1 = jnp.real(zf)[..., : F_ * P].reshape(B, C, F_, P)
    z2 = jnp.imag(zf)[..., : F_ * P].reshape(B, C, F_, P)
    # NOTE: the original permutes to (B,F,C,.) and back; with shufflers /
    # CrossDConv bypassed every intervening op is a per-row Linear, so the
    # natural (B,C,F,.) layout is mathematically identical (two fewer HBM
    # transposes) and the head-input flatten stays frequency-major as required.
    x = jnp.concatenate([z1, z2], axis=-1).astype(jnp.bfloat16)     # (B, C, F, 2P)
    x = x.reshape(B * C, F_ * 2 * P)                                # free reshape

    z1f, z2f = fused_cfview_core(x, params)                         # (B*C, pred) each

    zt = jnp.fft.ifft((z1f + 1j * z2f).reshape(B, C, pred), axis=-1)
    cat = jnp.concatenate([jnp.real(zt), jnp.imag(zt)], axis=-1)    # (B, C, 2*pred)
    # ircom: smaller than one MXU pass — plain XLA so it fuses with the concat.
    # TODO(synk): give ircom a (lane-dense) Pallas path only at production pred_len.
    return cat @ params["ircom_w"] + params["ircom_b"]              # (B, C, pred)


# ----------------------------------------------------------------------------
# Pure-f32 reference with the original per-layer structure (validation only)
# ----------------------------------------------------------------------------
def cfview_reference(z, raw, *, patch_len):
    B, C, L = z.shape
    P = patch_len
    F_ = (L - P) // P + 1
    zf = jnp.fft.fft(z, axis=-1)
    z1 = jnp.real(zf)[..., : F_ * P].reshape(B, C, F_, P)
    z2 = jnp.imag(zf)[..., : F_ * P].reshape(B, C, F_, P)
    x = jnp.concatenate([z1, z2], axis=-1)
    h = x @ raw["we"] + raw["be"]
    h = h @ raw["wm"] + raw["bm"]
    zr = h @ raw["wr"] + raw["br"]
    zi = h @ raw["wi"] + raw["bi"]

    def head(t, ws, bs, w4, b4):
        t = t.reshape(B, C, -1)                  # frequency-major flatten
        for l in range(3):
            t = jax.nn.relu(t @ ws[l] + bs[l]) + t
        return t @ w4 + b4

    z1f = head(zr, raw["h1_w"], raw["h1_b"], raw["h1_w4"], raw["h1_b4"])
    z2f = head(zi, raw["h2_w"], raw["h2_b"], raw["h2_w4"], raw["h2_b4"])
    zt = jnp.fft.ifft(z1f + 1j * z2f, axis=-1)
    cat = jnp.concatenate([jnp.real(zt), jnp.imag(zt)], axis=-1)
    return cat @ raw["wirc"] + raw["birc"]


# ----------------------------------------------------------------------------
# Main
# ----------------------------------------------------------------------------
if __name__ == "__main__":
    B = 2            # batch
    enc_in = 4       # channels C
    seq_len = 16     # L
    patch_len = 4
    cf_dim = 32
    d_model = 16
    pred_len = 8
    num_frequency = (seq_len - patch_len) // patch_len + 1   # 4 -> nf=128, 2nf=256

    key = jax.random.PRNGKey(0)
    kp, kx = jax.random.split(key)
    params, raw = make_cfview_params(
        kp, patch_len=patch_len, cf_dim=cf_dim, d_model=d_model,
        num_frequency=num_frequency, pred_len=pred_len)
    z = jax.random.normal(kx, (B, enc_in, seq_len), jnp.float32)

    fwd = jax.jit(functools.partial(cfview_forward, patch_len=patch_len))
    out = jax.block_until_ready(fwd(z, params))

    assert out.shape == (B, enc_in, pred_len), out.shape
    assert out.dtype == jnp.float32
    assert bool(jnp.all(jnp.isfinite(out)))

    # Loose-tolerance check vs. the f32 original-structure reference (kernel
    # runs bf16 weights/activations at every MXU dot).
    ref = cfview_reference(z, raw, patch_len=patch_len)
    err = float(jnp.max(jnp.abs(out - ref)))
    scale = float(jnp.max(jnp.abs(ref)))
    assert err <= 0.1 * scale + 1e-2, (err, scale)

    print("KERNEL_OK")
</pallas_src>

<mosaic_0001>
module attributes {stable_mosaic.version = 11 : i64} {
  func.func @_cfview_core_kernel(%arg0: i32, %arg1: memref<8x32xbf16, #tpu.memory_space<vmem>>, %arg2: memref<32x256xbf16, #tpu.memory_space<vmem>>, %arg3: memref<1x256xf32, #tpu.memory_space<vmem>>, %arg4: memref<3x256x256xbf16, #tpu.memory_space<vmem>>, %arg5: memref<3x1x256xf32, #tpu.memory_space<vmem>>, %arg6: memref<256x8xbf16, #tpu.memory_space<vmem>>, %arg7: memref<1x8xf32, #tpu.memory_space<vmem>>, %arg8: memref<256x8xbf16, #tpu.memory_space<vmem>>, %arg9: memref<1x8xf32, #tpu.memory_space<vmem>>, %arg10: memref<8x8xf32, #tpu.memory_space<vmem>>, %arg11: memref<8x8xf32, #tpu.memory_space<vmem>>) attributes {dimension_semantics = [#tpu.dimension_semantics<parallel>], iteration_bounds = array<i64: 1>, scalar_prefetch = 0 : i64, scratch_operands = 0 : i64, tpu.core_type = #tpu.core_type<tc>, window_params = [{transform_indices = @transform_0, window_bounds = array<i64: 8, 32>}, {pipeline_mode = #tpu.pipeline_mode<synchronous>, transform_indices = @transform_1, window_bounds = array<i64: 32, 256>}, {pipeline_mode = #tpu.pipeline_mode<synchronous>, transform_indices = @transform_2, window_bounds = array<i64: 1, 256>}, {pipeline_mode = #tpu.pipeline_mode<synchronous>, transform_indices = @transform_3, window_bounds = array<i64: 3, 256, 256>}, {pipeline_mode = #tpu.pipeline_mode<synchronous>, transform_indices = @transform_4, window_bounds = array<i64: 3, 1, 256>}, {pipeline_mode = #tpu.pipeline_mode<synchronous>, transform_indices = @transform_5, window_bounds = array<i64: 256, 8>}, {pipeline_mode = #tpu.pipeline_mode<synchronous>, transform_indices = @transform_6, window_bounds = array<i64: 1, 8>}, {pipeline_mode = #tpu.pipeline_mode<synchronous>, transform_indices = @transform_7, window_bounds = array<i64: 256, 8>}, {pipeline_mode = #tpu.pipeline_mode<synchronous>, transform_indices = @transform_8, window_bounds = array<i64: 1, 8>}, {transform_indices = @transform_9, window_bounds = array<i64: 8, 8>}, {transform_indices = @transform_10, window_bounds = array<i64: 8, 8>}]} {
    %c0 = arith.constant 0 : index
    %c0_0 = arith.constant 0 : index
    %0 = vector.load %arg1[%c0, %c0_0] : memref<8x32xbf16, #tpu.memory_space<vmem>>, vector<8x32xbf16>
    %c0_1 = arith.constant 0 : index
    %c0_2 = arith.constant 0 : index
    %1 = vector.load %arg2[%c0_1, %c0_2] : memref<32x256xbf16, #tpu.memory_space<vmem>>, vector<32x256xbf16>
    %cst = arith.constant dense<0.000000e+00> : vector<8x256xf32>
    %2 = tpu.matmul %0, %1, %cst {dimension_numbers = #tpu.dot_dimension_numbers<[1], [0], [0], [1], [0, 0, 1, 1], [], []>} : vector<8x32xbf16>, vector<32x256xbf16>, vector<8x256xf32> -> vector<8x256xf32>
    %c0_3 = arith.constant 0 : index
    %c0_4 = arith.constant 0 : index
    %3 = vector.load %arg3[%c0_3, %c0_4] : memref<1x256xf32, #tpu.memory_space<vmem>>, vector<1x256xf32>
    %4 = vector.broadcast %3 : vector<1x256xf32> to vector<8x256xf32>
    %5 = arith.addf %2, %4 : vector<8x256xf32>
    %6 = arith.truncf %5 : vector<8x256xf32> to vector<8x256xbf16>
    %c0_5 = arith.constant 0 : index
    %c0_6 = arith.constant 0 : index
    %c0_7 = arith.constant 0 : index
    %7 = vector.load %arg4[%c0_5, %c0_6, %c0_7] : memref<3x256x256xbf16, #tpu.memory_space<vmem>>, vector<1x256x256xbf16>
    %8 = vector.shape_cast %7 : vector<1x256x256xbf16> to vector<256x256xbf16>
    %cst_8 = arith.constant dense<0.000000e+00> : vector<8x256xf32>
    %9 = tpu.matmul %6, %8, %cst_8 {dimension_numbers = #tpu.dot_dimension_numbers<[1], [0], [0], [1], [0, 0, 1, 1], [], []>} : vector<8x256xbf16>, vector<256x256xbf16>, vector<8x256xf32> -> vector<8x256xf32>
    %c0_9 = arith.constant 0 : index
    %c0_10 = arith.constant 0 : index
    %c0_11 = arith.constant 0 : index
    %10 = vector.load %arg5[%c0_9, %c0_10, %c0_11] : memref<3x1x256xf32, #tpu.memory_space<vmem>>, vector<1x1x256xf32>
    %11 = vector.shape_cast %10 : vector<1x1x256xf32> to vector<1x256xf32>
    %12 = vector.broadcast %11 : vector<1x256xf32> to vector<8x256xf32>
    %13 = arith.addf %9, %12 : vector<8x256xf32>
    %cst_12 = arith.constant 0.000000e+00 : f32
    %14 = vector.broadcast %cst_12 : f32 to vector<8x256xf32>
    %15 = arith.maximumf %13, %14 : vector<8x256xf32>
    %16 = arith.addf %15, %5 : vector<8x256xf32>
    %17 = arith.truncf %16 : vector<8x256xf32> to vector<8x256xbf16>
    %c1 = arith.constant 1 : index
    %c0_13 = arith.constant 0 : index
    %c0_14 = arith.constant 0 : index
    %18 = vector.load %arg4[%c1, %c0_13, %c0_14] : memref<3x256x256xbf16, #tpu.memory_space<vmem>>, vector<1x256x256xbf16>
    %19 = vector.shape_cast %18 : vector<1x256x256xbf16> to vector<256x256xbf16>
    %cst_15 = arith.constant dense<0.000000e+00> : vector<8x256xf32>
    %20 = tpu.matmul %17, %19, %cst_15 {dimension_numbers = #tpu.dot_dimension_numbers<[1], [0], [0], [1], [0, 0, 1, 1], [], []>} : vector<8x256xbf16>, vector<256x256xbf16>, vector<8x256xf32> -> vector<8x256xf32>
    %c1_16 = arith.constant 1 : index
    %c0_17 = arith.constant 0 : index
    %c0_18 = arith.constant 0 : index
    %21 = vector.load %arg5[%c1_16, %c0_17, %c0_18] : memref<3x1x256xf32, #tpu.memory_space<vmem>>, vector<1x1x256xf32>
    %22 = vector.shape_cast %21 : vector<1x1x256xf32> to vector<1x256xf32>
    %23 = vector.broadcast %22 : vector<1x256xf32> to vector<8x256xf32>
    %24 = arith.addf %20, %23 : vector<8x256xf32>
    %cst_19 = arith.constant 0.000000e+00 : f32
    %25 = vector.broadcast %cst_19 : f32 to vector<8x256xf32>
    %26 = arith.maximumf %24, %25 : vector<8x256xf32>
    %27 = arith.addf %26, %16 : vector<8x256xf32>
    %28 = arith.truncf %27 : vector<8x256xf32> to vector<8x256xbf16>
    %c2 = arith.constant 2 : index
    %c0_20 = arith.constant 0 : index
    %c0_21 = arith.constant 0 : index
    %29 = vector.load %arg4[%c2, %c0_20, %c0_21] : memref<3x256x256xbf16, #tpu.memory_space<vmem>>, vector<1x256x256xbf16>
    %30 = vector.shape_cast %29 : vector<1x256x256xbf16> to vector<256x256xbf16>
    %cst_22 = arith.constant dense<0.000000e+00> : vector<8x256xf32>
    %31 = tpu.matmul %28, %30, %cst_22 {dimension_numbers = #tpu.dot_dimension_numbers<[1], [0], [0], [1], [0, 0, 1, 1], [], []>} : vector<8x256xbf16>, vector<256x256xbf16>, vector<8x256xf32> -> vector<8x256xf32>
    %c2_23 = arith.constant 2 : index
    %c0_24 = arith.constant 0 : index
    %c0_25 = arith.constant 0 : index
    %32 = vector.load %arg5[%c2_23, %c0_24, %c0_25] : memref<3x1x256xf32, #tpu.memory_space<vmem>>, vector<1x1x256xf32>
    %33 = vector.shape_cast %32 : vector<1x1x256xf32> to vector<1x256xf32>
    %34 = vector.broadcast %33 : vector<1x256xf32> to vector<8x256xf32>
    %35 = arith.addf %31, %34 : vector<8x256xf32>
    %cst_26 = arith.constant 0.000000e+00 : f32
    %36 = vector.broadcast %cst_26 : f32 to vector<8x256xf32>
    %37 = arith.maximumf %35, %36 : vector<8x256xf32>
    %38 = arith.addf %37, %27 : vector<8x256xf32>
    %39 = arith.truncf %38 : vector<8x256xf32> to vector<8x256xbf16>
    %c0_27 = arith.constant 0 : index
    %c0_28 = arith.constant 0 : index
    %40 = vector.load %arg6[%c0_27, %c0_28] : memref<256x8xbf16, #tpu.memory_space<vmem>>, vector<256x8xbf16>
    %cst_29 = arith.constant dense<0.000000e+00> : vector<8x8xf32>
    %41 = tpu.matmul %39, %40, %cst_29 {dimension_numbers = #tpu.dot_dimension_numbers<[1], [0], [0], [1], [0, 0, 1, 1], [], []>} : vector<8x256xbf16>, vector<256x8xbf16>, vector<8x8xf32> -> vector<8x8xf32>
    %c0_30 = arith.constant 0 : index
    %c0_31 = arith.constant 0 : index
    %42 = vector.load %arg7[%c0_30, %c0_31] : memref<1x8xf32, #tpu.memory_space<vmem>>, vector<1x8xf32>
    %43 = vector.broadcast %42 : vector<1x8xf32> to vector<8x8xf32>
    %44 = arith.addf %41, %43 : vector<8x8xf32>
    %c0_32 = arith.constant 0 : index
    %c0_33 = arith.constant 0 : index
    %45 = vector.load %arg10[%c0_32, %c0_33] : memref<8x8xf32, #tpu.memory_space<vmem>>, vector<8x8xf32>
    tpu.vector_store %arg10[%c0_32, %c0_33], %44 {strides = array<i32>} : memref<8x8xf32, #tpu.memory_space<vmem>>, vector<8x8xf32>,
    %c0_34 = arith.constant 0 : index
    %c0_35 = arith.constant 0 : index
    %46 = vector.load %arg8[%c0_34, %c0_35] : memref<256x8xbf16, #tpu.memory_space<vmem>>, vector<256x8xbf16>
    %cst_36 = arith.constant dense<0.000000e+00> : vector<8x8xf32>
    %47 = tpu.matmul %39, %46, %cst_36 {dimension_numbers = #tpu.dot_dimension_numbers<[1], [0], [0], [1], [0, 0, 1, 1], [], []>} : vector<8x256xbf16>, vector<256x8xbf16>, vector<8x8xf32> -> vector<8x8xf32>
    %c0_37 = arith.constant 0 : index
    %c0_38 = arith.constant 0 : index
    %48 = vector.load %arg9[%c0_37, %c0_38] : memref<1x8xf32, #tpu.memory_space<vmem>>, vector<1x8xf32>
    %49 = vector.broadcast %48 : vector<1x8xf32> to vector<8x8xf32>
    %50 = arith.addf %47, %49 : vector<8x8xf32>
    %c0_39 = arith.constant 0 : index
    %c0_40 = arith.constant 0 : index
    %51 = vector.load %arg11[%c0_39, %c0_40] : memref<8x8xf32, #tpu.memory_space<vmem>>, vector<8x8xf32>
    tpu.vector_store %arg11[%c0_39, %c0_40], %50 {strides = array<i32>} : memref<8x8xf32, #tpu.memory_space<vmem>>, vector<8x8xf32>,
    return
  }
  func.func @transform_0(%arg0: i32) -> (i32, i32) {
    %c0_i32 = arith.constant 0 : i32
    %c0_i32_0 = arith.constant 0 : i32
    return %arg0, %c0_i32 : i32, i32
  }
  func.func @transform_1(%arg0: i32) -> (i32, i32) {
    %c0_i32 = arith.constant 0 : i32
    %c0_i32_0 = arith.constant 0 : i32
    %c0_i32_1 = arith.constant 0 : i32
    return %c0_i32, %c0_i32_0 : i32, i32
  }
  func.func @transform_2(%arg0: i32) -> (i32, i32) {
    %c0_i32 = arith.constant 0 : i32
    %c0_i32_0 = arith.constant 0 : i32
    %c0_i32_1 = arith.constant 0 : i32
    return %c0_i32, %c0_i32_0 : i32, i32
  }
  func.func @transform_3(%arg0: i32) -> (i32, i32, i32) {
    %c0_i32 = arith.constant 0 : i32
    %c0_i32_0 = arith.constant 0 : i32
    %c0_i32_1 = arith.constant 0 : i32
    %c0_i32_2 = arith.constant 0 : i32
    return %c0_i32, %c0_i32_0, %c0_i32_1 : i32, i32, i32
  }
  func.func @transform_4(%arg0: i32) -> (i32, i32, i32) {
    %c0_i32 = arith.constant 0 : i32
    %c0_i32_0 = arith.constant 0 : i32
    %c0_i32_1 = arith.constant 0 : i32
    %c0_i32_2 = arith.constant 0 : i32
    return %c0_i32, %c0_i32_0, %c0_i32_1 : i32, i32, i32
  }
  func.func @transform_5(%arg0: i32) -> (i32, i32) {
    %c0_i32 = arith.constant 0 : i32
    %c0_i32_0 = arith.constant 0 : i32
    %c0_i32_1 = arith.constant 0 : i32
    return %c0_i32, %c0_i32_0 : i32, i32
  }
  func.func @transform_6(%arg0: i32) -> (i32, i32) {
    %c0_i32 = arith.constant 0 : i32
    %c0_i32_0 = arith.constant 0 : i32
    %c0_i32_1 = arith.constant 0 : i32
    return %c0_i32, %c0_i32_0 : i32, i32
  }
  func.func @transform_7(%arg0: i32) -> (i32, i32) {
    %c0_i32 = arith.constant 0 : i32
    %c0_i32_0 = arith.constant 0 : i32
    %c0_i32_1 = arith.constant 0 : i32
    return %c0_i32, %c0_i32_0 : i32, i32
  }
  func.func @transform_8(%arg0: i32) -> (i32, i32) {
    %c0_i32 = arith.constant 0 : i32
    %c0_i32_0 = arith.constant 0 : i32
    %c0_i32_1 = arith.constant 0 : i32
    return %c0_i32, %c0_i32_0 : i32, i32
  }
  func.func @transform_9(%arg0: i32) -> (i32, i32) {
    %c0_i32 = arith.constant 0 : i32
    %c0_i32_0 = arith.constant 0 : i32
    return %arg0, %c0_i32 : i32, i32
  }
  func.func @transform_10(%arg0: i32) -> (i32, i32) {
    %c0_i32 = arith.constant 0 : i32
    %c0_i32_0 = arith.constant 0 : i32
    return %arg0, %c0_i32 : i32, i32
  }
}

</mosaic_0001>

<llo_original>
// kernel: cfview_forward.1
$region0: #{cfview_forward.1}
  #allocation0 [shape = 'u32[]', space=smem, size = 0x4, offset = 0x4, fixed_abs, tag = 'smem constant byte address 0x4 - core index']
  #allocation1 [shape = 'u32[72,128]{1,0:T(1,128)}', space=vmem, size = 0x9000, scoped, tag = 'internal scratch']
  %s0 = inlined_call_operand.vmem [shape: bf16[8,32], index: 0, kind: input, shape index: {}]
  %s1 = inlined_call_operand.vmem [shape: bf16[32,256], index: 1, kind: input, shape index: {}]
  %s2 = inlined_call_operand.vmem [shape: f32[1,256], index: 2, kind: input, shape index: {}]
  %s3 = inlined_call_operand.hbm [shape: bf16[3,256,256], index: 3, kind: input, shape index: {}]
  %s4 = inlined_call_operand.vmem [shape: f32[3,1,256], index: 4, kind: input, shape index: {}]
  %s5 = inlined_call_operand.vmem [shape: bf16[256,8], index: 5, kind: input, shape index: {}]
  %s6 = inlined_call_operand.vmem [shape: f32[1,8], index: 6, kind: input, shape index: {}]
  %s7 = inlined_call_operand.vmem [shape: bf16[256,8], index: 7, kind: input, shape index: {}]
  %s8 = inlined_call_operand.vmem [shape: f32[1,8], index: 8, kind: input, shape index: {}]
  %s9 = inlined_call_operand.vmem [shape: f32[8,8], index: 9, kind: output, shape index: {0}]
  %s10 = inlined_call_operand.vmem [shape: f32[8,8], index: 10, kind: output, shape index: {1}]
  %11 = xla_tuple %s9, %s10
  %s12 = sld [smem:[#allocation0]]
  $region58: #{cfview_forward.1} parent=0
    _
  %s14 = ssub.s32 1, %s12
  %s15 = scalar_select 0, %s14, %s12
  $region1: #{cfview_forward.1} parent=0
    #allocation2 [shape = 'u8[393216]{0}', space=vmem, size = 0x60000, scoped, tag = 'input window, operand 3, single buffered']
    #allocation3 [shape = 's32[1]{0}', space=sflag, size = 0x4, scoped, tag = 'scoped memory for cfview_forward.1']
    %16 = vsyncpa [#allocation3], 0
    // Predicated region
    $region2: #{cfview_forward.1} parent=1 // pred_check
      _
    $region3: #{cfview_forward.1} parent=1 // pred_check_branch
      %18 = sbr.rel (0) target = $region5
    $region4: #{cfview_forward.1} parent=1 // pred_region
      _
    $region5: #{cfview_forward.1} parent=1 // pred_fallthru
      _
    // Predicated region
    $region6: #{cfview_forward.1} parent=1 // pred_check
      _
    $region7: #{cfview_forward.1} parent=1 // pred_check_branch
      %20 = sbr.rel (0) target = $region9
    $region8: #{cfview_forward.1} parent=1 // pred_region
      _
    $region9: #{cfview_forward.1} parent=1 // pred_fallthru
      _
    // Predicated region
    $region10: #{cfview_forward.1} parent=1 // pred_check
      _
    $region11: #{cfview_forward.1} parent=1 // pred_check_branch
      %22 = sbr.rel (0) target = $region13
    $region12: #{cfview_forward.1} parent=1 // pred_region
      _
    $region13: #{cfview_forward.1} parent=1 // pred_fallthru
      _
    // Predicated region
    $region14: #{cfview_forward.1} parent=1 // pred_check
      _
    $region15: #{cfview_forward.1} parent=1 // pred_check_branch
      %24 = sbr.rel (0) target = $region17
    $region16: #{cfview_forward.1} parent=1 // pred_region
      %26 = vsyncadd [#allocation3], 0
      %s27 = sshll.u32 %s3, 4
      %s28 = int_to_ptr.hbm [resolvable:$true] %s27
      %s29 = sshll.u32 [#allocation2], 4
      %s30 = int_to_ptr.vmem [resolvable:$true] %s29
      %35 = dma.hbm_to_vmem [thread:$0]  %s28, 12288, %s30, [#allocation3], 128, 128, 8
    $region17: #{cfview_forward.1} parent=1 // pred_fallthru
      _
    // Predicated region
    $region18: #{cfview_forward.1} parent=1 // pred_check
      _
    $region19: #{cfview_forward.1} parent=1 // pred_check_branch
      %37 = sbr.rel (0) target = $region21
    $region20: #{cfview_forward.1} parent=1 // pred_region
      _
    $region21: #{cfview_forward.1} parent=1 // pred_fallthru
      _
    // Predicated region
    $region22: #{cfview_forward.1} parent=1 // pred_check
      _
    $region23: #{cfview_forward.1} parent=1 // pred_check_branch
      %39 = sbr.rel (0) target = $region25
    $region24: #{cfview_forward.1} parent=1 // pred_region
      _
    $region25: #{cfview_forward.1} parent=1 // pred_fallthru
      _
    // Predicated region
    $region26: #{cfview_forward.1} parent=1 // pred_check
      _
    $region27: #{cfview_forward.1} parent=1 // pred_check_branch
      %41 = sbr.rel (0) target = $region29
    $region28: #{cfview_forward.1} parent=1 // pred_region
      _
    $region29: #{cfview_forward.1} parent=1 // pred_fallthru
      _
    // Predicated region
    $region30: #{cfview_forward.1} parent=1 // pred_check
      _
    $region31: #{cfview_forward.1} parent=1 // pred_check_branch
      %43 = sbr.rel (0) target = $region33
    $region32: #{cfview_forward.1} parent=1 // pred_region
      _
    $region33: #{cfview_forward.1} parent=1 // pred_fallthru
      _
    // Predicated region
    $region34: #{cfview_forward.1} parent=1 // pred_check
      _
    $region35: #{cfview_forward.1} parent=1 // pred_check_branch
      %45 = sbr.rel (0) target = $region37
    $region36: #{cfview_forward.1} parent=1 // pred_region
      _
    $region37: #{cfview_forward.1} parent=1 // pred_fallthru
      _
    // Predicated region
    $region38: #{cfview_forward.1} parent=1 // pred_check
      _
    $region39: #{cfview_forward.1} parent=1 // pred_check_branch
      %47 = sbr.rel (0) target = $region41
    $region40: #{cfview_forward.1} parent=1 // pred_region
      %49 = dma.done [#allocation3], 12288
    $region41: #{cfview_forward.1} parent=1 // pred_fallthru
      _
    %v51 = vld [vmem:[%s0] sm:$0xf]
    %v52 = vld [vmem:[%s1] sm:$0xff]
    %v53 = vld [vmem:[%s1 + $0x8] sm:$0xff]
    %v54 = vld [vmem:[%s1 + $0x10] sm:$0xff]
    %v55 = vld [vmem:[%s1 + $0x18] sm:$0xff]
    %v56 = vld [vmem:[%s2] sm:$0x3]
    %v58 = vperm.slane %v56, 0
    %v59 = vperm.slane %v56, 1
    %v66 = vunpack.c.l.b16 %v52
    %v67 = vunpack.c.h.b16 %v52
    %v68 = vunpack.c.l.b16 %v53
    %v69 = vunpack.c.h.b16 %v53
    %v70 = vunpack.c.l.b16 %v54
    %v71 = vunpack.c.h.b16 %v54
    %v72 = vunpack.c.l.b16 %v55
    %v73 = vunpack.c.h.b16 %v55
    %v74 = vpack.c.b16 %v68, %v66
    %v75 = vpack.c.b16 %v69, %v67
    %v76 = vpack.c.b16 %v72, %v70
    %v77 = vpack.c.b16 %v73, %v71
    %vm82 = vcmask 261120
    %v84 = vsel %vm82, %v51, 0
    %86 = vmatpush.bf16.msra.mxu0 0
    %87 = vmatpush.bf16.msra.mxu0 0
    %88 = vmatpush.bf16.msra.mxu0 0
    %89 = vmatpush.bf16.msra.mxu0 0
    %90 = vmatpush.bf16.msra.mxu0 0
    %91 = vmatpush.bf16.msra.mxu0 0
    %92 = vmatpush.bf16.msra.mxu0 %v76
    %93 = vmatpush.bf16.msra.mxu0 %v74
    %94 = vmatmul.bf16.gmra.mxu0 %v84
    %v95 = vpop.f32.mrf.mxu0
    %v96 = vadd.f32 %v58, %v95
    %v97 = vpop.f32.mrf.mxu0
    %98 = vdwg.mxu0
    %99 = vmatpush.bf16.msra.mxu0 0
    %100 = vmatpush.bf16.msra.mxu0 0
    %101 = vmatpush.bf16.msra.mxu0 0
    %102 = vmatpush.bf16.msra.mxu0 0
    %103 = vmatpush.bf16.msra.mxu0 0
    %104 = vmatpush.bf16.msra.mxu0 0
    %105 = vmatpush.bf16.msra.mxu0 %v77
    %106 = vmatpush.bf16.msra.mxu0 %v75
    %107 = vmatmul.bf16.gmra.mxu0 %v84
    %v108 = vpop.f32.mrf.mxu0
    %v109 = vadd.f32 %v59, %v108
    %v110 = vpop.f32.mrf.mxu0
    %111 = vdwg.mxu0
    %v112 = vpack.c.bf16 %v96, %v96
    %v113 = vpack.c.bf16 %v109, %v109
    %v114 = vld [vmem:[#allocation2] sm:$0xff]
    %v115 = vld [vmem:[#allocation2 + $0x8] sm:$0xff]
    %v116 = vld [vmem:[#allocation2 + $0x10] sm:$0xff]
    %v117 = vld [vmem:[#allocation2 + $0x18] sm:$0xff]
    %v118 = vld [vmem:[#allocation2 + $0x20] sm:$0xff]
    %v119 = vld [vmem:[#allocation2 + $0x28] sm:$0xff]
    %v120 = vld [vmem:[#allocation2 + $0x30] sm:$0xff]
    %v121 = vld [vmem:[#allocation2 + $0x38] sm:$0xff]
    %v122 = vld [vmem:[#allocation2 + $0x40] sm:$0xff]
    %v123 = vld [vmem:[#allocation2 + $0x48] sm:$0xff]
    %v124 = vld [vmem:[#allocation2 + $0x50] sm:$0xff]
    %v125 = vld [vmem:[#allocation2 + $0x58] sm:$0xff]
    %v126 = vld [vmem:[#allocation2 + $0x60] sm:$0xff]
    %v127 = vld [vmem:[#allocation2 + $0x68] sm:$0xff]
    %v128 = vld [vmem:[#allocation2 + $0x70] sm:$0xff]
    %v129 = vld [vmem:[#allocation2 + $0x78] sm:$0xff]
    %v130 = vld [vmem:[#allocation2 + $0x80] sm:$0xff]
    %v131 = vld [vmem:[#allocation2 + $0x88] sm:$0xff]
    %v132 = vld [vmem:[#allocation2 + $0x90] sm:$0xff]
    %v133 = vld [vmem:[#allocation2 + $0x98] sm:$0xff]
    %v134 = vld [vmem:[#allocation2 + $0xa0] sm:$0xff]
    %v135 = vld [vmem:[#allocation2 + $0xa8] sm:$0xff]
    %v136 = vld [vmem:[#allocation2 + $0xb0] sm:$0xff]
    %v137 = vld [vmem:[#allocation2 + $0xb8] sm:$0xff]
    %v138 = vld [vmem:[#allocation2 + $0xc0] sm:$0xff]
    %v139 = vld [vmem:[#allocation2 + $0xc8] sm:$0xff]
    %v140 = vld [vmem:[#allocation2 + $0xd0] sm:$0xff]
    %v141 = vld [vmem:[#allocation2 + $0xd8] sm:$0xff]
    %v142 = vld [vmem:[#allocation2 + $0xe0] sm:$0xff]
    %v143 = vld [vmem:[#allocation2 + $0xe8] sm:$0xff]
    %v144 = vld [vmem:[#allocation2 + $0xf0] sm:$0xff]
    %v145 = vld [vmem:[#allocation2 + $0xf8] sm:$0xff]
    %v146 = vld [vmem:[%s4] sm:$0x3]
    %v148 = vperm.slane %v146, 0
    %v149 = vperm.slane %v146, 1
    %v184 = vunpack.c.l.b16 %v114
    %v185 = vunpack.c.h.b16 %v114
    %v186 = vunpack.c.l.b16 %v115
    %v187 = vunpack.c.h.b16 %v115
    %v188 = vunpack.c.l.b16 %v116
    %v189 = vunpack.c.h.b16 %v116
    %v190 = vunpack.c.l.b16 %v117
    %v191 = vunpack.c.h.b16 %v117
    %v192 = vunpack.c.l.b16 %v118
    %v193 = vunpack.c.h.b16 %v118
    %v194 = vunpack.c.l.b16 %v119
    %v195 = vunpack.c.h.b16 %v119
    %v196 = vunpack.c.l.b16 %v120
    %v197 = vunpack.c.h.b16 %v120
    %v198 = vunpack.c.l.b16 %v121
    %v199 = vunpack.c.h.b16 %v121
    %v200 = vunpack.c.l.b16 %v122
    %v201 = vunpack.c.h.b16 %v122
    %v202 = vunpack.c.l.b16 %v123
    %v203 = vunpack.c.h.b16 %v123
    %v204 = vunpack.c.l.b16 %v124
    %v205 = vunpack.c.h.b16 %v124
    %v206 = vunpack.c.l.b16 %v125
    %v207 = vunpack.c.h.b16 %v125
    %v208 = vunpack.c.l.b16 %v126
    %v209 = vunpack.c.h.b16 %v126
    %v210 = vunpack.c.l.b16 %v127
    %v211 = vunpack.c.h.b16 %v127
    %v212 = vunpack.c.l.b16 %v128
    %v213 = vunpack.c.h.b16 %v128
    %v214 = vunpack.c.l.b16 %v129
    %v215 = vunpack.c.h.b16 %v129
    %v216 = vunpack.c.l.b16 %v130
    %v217 = vunpack.c.h.b16 %v130
    %v218 = vunpack.c.l.b16 %v131
    %v219 = vunpack.c.h.b16 %v131
    %v220 = vunpack.c.l.b16 %v132
    %v221 = vunpack.c.h.b16 %v132
    %v222 = vunpack.c.l.b16 %v133
    %v223 = vunpack.c.h.b16 %v133
    %v224 = vunpack.c.l.b16 %v134
    %v225 = vunpack.c.h.b16 %v134
    %v226 = vunpack.c.l.b16 %v135
    %v227 = vunpack.c.h.b16 %v135
    %v228 = vunpack.c.l.b16 %v136
    %v229 = vunpack.c.h.b16 %v136
    %v230 = vunpack.c.l.b16 %v137
    %v231 = vunpack.c.h.b16 %v137
    %v232 = vunpack.c.l.b16 %v138
    %v233 = vunpack.c.h.b16 %v138
    %v234 = vunpack.c.l.b16 %v139
    %v235 = vunpack.c.h.b16 %v139
    %v236 = vunpack.c.l.b16 %v140
    %v237 = vunpack.c.h.b16 %v140
    %v238 = vunpack.c.l.b16 %v141
    %v239 = vunpack.c.h.b16 %v141
    %v240 = vunpack.c.l.b16 %v142
    %v241 = vunpack.c.h.b16 %v142
    %v242 = vunpack.c.l.b16 %v143
    %v243 = vunpack.c.h.b16 %v143
    %v244 = vunpack.c.l.b16 %v144
    %v245 = vunpack.c.h.b16 %v144
    %v246 = vunpack.c.l.b16 %v145
    %v247 = vunpack.c.h.b16 %v145
    %v248 = vpack.c.b16 %v186, %v184
    %v249 = vpack.c.b16 %v187, %v185
    %v250 = vpack.c.b16 %v190, %v188
    %v251 = vpack.c.b16 %v191, %v189
    %v252 = vpack.c.b16 %v194, %v192
    %v253 = vpack.c.b16 %v195, %v193
    %v254 = vpack.c.b16 %v198, %v196
    %v255 = vpack.c.b16 %v199, %v197
    %v256 = vpack.c.b16 %v202, %v200
    %v257 = vpack.c.b16 %v203, %v201
    %v258 = vpack.c.b16 %v206, %v204
    %v259 = vpack.c.b16 %v207, %v205
    %v260 = vpack.c.b16 %v210, %v208
    %v261 = vpack.c.b16 %v211, %v209
    %v262 = vpack.c.b16 %v214, %v212
    %v263 = vpack.c.b16 %v215, %v213
    %v264 = vpack.c.b16 %v218, %v216
    %v265 = vpack.c.b16 %v219, %v217
    %v266 = vpack.c.b16 %v222, %v220
    %v267 = vpack.c.b16 %v223, %v221
    %v268 = vpack.c.b16 %v226, %v224
    %v269 = vpack.c.b16 %v227, %v225
    %v270 = vpack.c.b16 %v230, %v228
    %v271 = vpack.c.b16 %v231, %v229
    %v272 = vpack.c.b16 %v234, %v232
    %v273 = vpack.c.b16 %v235, %v233
    %v274 = vpack.c.b16 %v238, %v236
    %v275 = vpack.c.b16 %v239, %v237
    %v276 = vpack.c.b16 %v242, %v240
    %v277 = vpack.c.b16 %v243, %v241
    %v278 = vpack.c.b16 %v246, %v244
    %v279 = vpack.c.b16 %v247, %v245
    %312 = vmatpush.bf16.msra.mxu0 %v262
    %313 = vmatpush.bf16.msra.mxu0 %v260
    %314 = vmatpush.bf16.msra.mxu0 %v258
    %315 = vmatpush.bf16.msra.mxu0 %v256
    %316 = vmatpush.bf16.msra.mxu0 %v254
    %317 = vmatpush.bf16.msra.mxu0 %v252
    %318 = vmatpush.bf16.msra.mxu0 %v250
    %319 = vmatpush.bf16.msra.mxu0 %v248
    %320 = vmatmul.bf16.gmra.mxu0 %v112
    %v321 = vpop.f32.mrf.mxu0
    %v322 = vadd.f32 %v148, %v321
    %v323 = vpop.f32.mrf.mxu0
    %324 = vdwg.mxu0
    %325 = vmatpush.bf16.msra.mxu0 %v278
    %326 = vmatpush.bf16.msra.mxu0 %v276
    %327 = vmatpush.bf16.msra.mxu0 %v274
    %328 = vmatpush.bf16.msra.mxu0 %v272
    %329 = vmatpush.bf16.msra.mxu0 %v270
    %330 = vmatpush.bf16.msra.mxu0 %v268
    %331 = vmatpush.bf16.msra.mxu0 %v266
    %332 = vmatpush.bf16.msra.mxu0 %v264
    %333 = vmatmul.bf16.gmra.mxu0 %v113
    %v334 = vpop.f32.mrf.mxu0
    %v335 = vadd.f32 %v322, %v334
    %v336 = vpop.f32.mrf.mxu0
    %337 = vdwg.mxu0
    %338 = vmatpush.bf16.msra.mxu0 %v263
    %339 = vmatpush.bf16.msra.mxu0 %v261
    %340 = vmatpush.bf16.msra.mxu0 %v259
    %341 = vmatpush.bf16.msra.mxu0 %v257
    %342 = vmatpush.bf16.msra.mxu0 %v255
    %343 = vmatpush.bf16.msra.mxu0 %v253
    %344 = vmatpush.bf16.msra.mxu0 %v251
    %345 = vmatpush.bf16.msra.mxu0 %v249
    %346 = vmatmul.bf16.gmra.mxu0 %v112
    %v347 = vpop.f32.mrf.mxu0
    %v348 = vadd.f32 %v149, %v347
    %v349 = vpop.f32.mrf.mxu0
    %350 = vdwg.mxu0
    %351 = vmatpush.bf16.msra.mxu0 %v279
    %352 = vmatpush.bf16.msra.mxu0 %v277
    %353 = vmatpush.bf16.msra.mxu0 %v275
    %354 = vmatpush.bf16.msra.mxu0 %v273
    %355 = vmatpush.bf16.msra.mxu0 %v271
    %356 = vmatpush.bf16.msra.mxu0 %v269
    %357 = vmatpush.bf16.msra.mxu0 %v267
    %358 = vmatpush.bf16.msra.mxu0 %v265
    %359 = vmatmul.bf16.gmra.mxu0 %v113
    %v360 = vpop.f32.mrf.mxu0
    %v361 = vadd.f32 %v348, %v360
    %v362 = vpop.f32.mrf.mxu0
    %363 = vdwg.mxu0
    %v364 = vmax.f32 %v335, 0.0
    %v365 = vmax.f32 %v361, 0.0
    %v366 = vadd.f32 %v364, %v96
    %v367 = vadd.f32 %v365, %v109
    %v368 = vpack.c.bf16 %v366, %v366
    %v369 = vpack.c.bf16 %v367, %v367
    %s370 = scalar_lea.vmem [#allocation2], 256
    %v371 = vld [vmem:[%s370] sm:$0xff]
    %v372 = vld [vmem:[%s370 + $0x8] sm:$0xff]
    %v373 = vld [vmem:[%s370 + $0x10] sm:$0xff]
    %v374 = vld [vmem:[%s370 + $0x18] sm:$0xff]
    %v375 = vld [vmem:[%s370 + $0x20] sm:$0xff]
    %v376 = vld [vmem:[%s370 + $0x28] sm:$0xff]
    %v377 = vld [vmem:[%s370 + $0x30] sm:$0xff]
    %v378 = vld [vmem:[%s370 + $0x38] sm:$0xff]
    %v379 = vld [vmem:[%s370 + $0x40] sm:$0xff]
    %v380 = vld [vmem:[%s370 + $0x48] sm:$0xff]
    %v381 = vld [vmem:[%s370 + $0x50] sm:$0xff]
    %v382 = vld [vmem:[%s370 + $0x58] sm:$0xff]
    %v383 = vld [vmem:[%s370 + $0x60] sm:$0xff]
    %v384 = vld [vmem:[%s370 + $0x68] sm:$0xff]
    %v385 = vld [vmem:[%s370 + $0x70] sm:$0xff]
    %v386 = vld [vmem:[%s370 + $0x78] sm:$0xff]
    %v387 = vld [vmem:[%s370 + $0x80] sm:$0xff]
    %v388 = vld [vmem:[%s370 + $0x88] sm:$0xff]
    %v389 = vld [vmem:[%s370 + $0x90] sm:$0xff]
    %v390 = vld [vmem:[%s370 + $0x98] sm:$0xff]
    %v391 = vld [vmem:[%s370 + $0xa0] sm:$0xff]
    %v392 = vld [vmem:[%s370 + $0xa8] sm:$0xff]
    %v393 = vld [vmem:[%s370 + $0xb0] sm:$0xff]
    %v394 = vld [vmem:[%s370 + $0xb8] sm:$0xff]
    %v395 = vld [vmem:[%s370 + $0xc0] sm:$0xff]
    %v396 = vld [vmem:[%s370 + $0xc8] sm:$0xff]
    %v397 = vld [vmem:[%s370 + $0xd0] sm:$0xff]
    %v398 = vld [vmem:[%s370 + $0xd8] sm:$0xff]
    %v399 = vld [vmem:[%s370 + $0xe0] sm:$0xff]
    %v400 = vld [vmem:[%s370 + $0xe8] sm:$0xff]
    %v401 = vld [vmem:[%s370 + $0xf0] sm:$0xff]
    %v402 = vld [vmem:[%s370 + $0xf8] sm:$0xff]
    %s403 = scalar_lea.vmem %s4, 2
    %v404 = vld [vmem:[%s403] sm:$0x3]
    %v406 = vperm.slane %v404, 0
    %v407 = vperm.slane %v404, 1
    %v442 = vunpack.c.l.b16 %v371
    %v443 = vunpack.c.h.b16 %v371
    %v444 = vunpack.c.l.b16 %v372
    %v445 = vunpack.c.h.b16 %v372
    %v446 = vunpack.c.l.b16 %v373
    %v447 = vunpack.c.h.b16 %v373
    %v448 = vunpack.c.l.b16 %v374
    %v449 = vunpack.c.h.b16 %v374
    %v450 = vunpack.c.l.b16 %v375
    %v451 = vunpack.c.h.b16 %v375
    %v452 = vunpack.c.l.b16 %v376
    %v453 = vunpack.c.h.b16 %v376
    %v454 = vunpack.c.l.b16 %v377
    %v455 = vunpack.c.h.b16 %v377
    %v456 = vunpack.c.l.b16 %v378
    %v457 = vunpack.c.h.b16 %v378
    %v458 = vunpack.c.l.b16 %v379
    %v459 = vunpack.c.h.b16 %v379
    %v460 = vunpack.c.l.b16 %v380
    %v461 = vunpack.c.h.b16 %v380
    %v462 = vunpack.c.l.b16 %v381
    %v463 = vunpack.c.h.b16 %v381
    %v464 = vunpack.c.l.b16 %v382
    %v465 = vunpack.c.h.b16 %v382
    %v466 = vunpack.c.l.b16 %v383
    %v467 = vunpack.c.h.b16 %v383
    %v468 = vunpack.c.l.b16 %v384
    %v469 = vunpack.c.h.b16 %v384
    %v470 = vunpack.c.l.b16 %v385
    %v471 = vunpack.c.h.b16 %v385
    %v472 = vunpack.c.l.b16 %v386
    %v473 = vunpack.c.h.b16 %v386
    %v474 = vunpack.c.l.b16 %v387
    %v475 = vunpack.c.h.b16 %v387
    %v476 = vunpack.c.l.b16 %v388
    %v477 = vunpack.c.h.b16 %v388
    %v478 = vunpack.c.l.b16 %v389
    %v479 = vunpack.c.h.b16 %v389
    %v480 = vunpack.c.l.b16 %v390
    %v481 = vunpack.c.h.b16 %v390
    %v482 = vunpack.c.l.b16 %v391
    %v483 = vunpack.c.h.b16 %v391
    %v484 = vunpack.c.l.b16 %v392
    %v485 = vunpack.c.h.b16 %v392
    %v486 = vunpack.c.l.b16 %v393
    %v487 = vunpack.c.h.b16 %v393
    %v488 = vunpack.c.l.b16 %v394
    %v489 = vunpack.c.h.b16 %v394
    %v490 = vunpack.c.l.b16 %v395
    %v491 = vunpack.c.h.b16 %v395
    %v492 = vunpack.c.l.b16 %v396
    %v493 = vunpack.c.h.b16 %v396
    %v494 = vunpack.c.l.b16 %v397
    %v495 = vunpack.c.h.b16 %v397
    %v496 = vunpack.c.l.b16 %v398
    %v497 = vunpack.c.h.b16 %v398
    %v498 = vunpack.c.l.b16 %v399
    %v499 = vunpack.c.h.b16 %v399
    %v500 = vunpack.c.l.b16 %v400
    %v501 = vunpack.c.h.b16 %v400
    %v502 = vunpack.c.l.b16 %v401
    %v503 = vunpack.c.h.b16 %v401
    %v504 = vunpack.c.l.b16 %v402
    %v505 = vunpack.c.h.b16 %v402
    %v506 = vpack.c.b16 %v444, %v442
    %v507 = vpack.c.b16 %v445, %v443
    %v508 = vpack.c.b16 %v448, %v446
    %v509 = vpack.c.b16 %v449, %v447
    %v510 = vpack.c.b16 %v452, %v450
    %v511 = vpack.c.b16 %v453, %v451
    %v512 = vpack.c.b16 %v456, %v454
    %v513 = vpack.c.b16 %v457, %v455
    %v514 = vpack.c.b16 %v460, %v458
    %v515 = vpack.c.b16 %v461, %v459
    %v516 = vpack.c.b16 %v464, %v462
    %v517 = vpack.c.b16 %v465, %v463
    %v518 = vpack.c.b16 %v468, %v466
    %v519 = vpack.c.b16 %v469, %v467
    %v520 = vpack.c.b16 %v472, %v470
    %v521 = vpack.c.b16 %v473, %v471
    %v522 = vpack.c.b16 %v476, %v474
    %v523 = vpack.c.b16 %v477, %v475
    %v524 = vpack.c.b16 %v480, %v478
    %v525 = vpack.c.b16 %v481, %v479
    %v526 = vpack.c.b16 %v484, %v482
    %v527 = vpack.c.b16 %v485, %v483
    %v528 = vpack.c.b16 %v488, %v486
    %v529 = vpack.c.b16 %v489, %v487
    %v530 = vpack.c.b16 %v492, %v490
    %v531 = vpack.c.b16 %v493, %v491
    %v532 = vpack.c.b16 %v496, %v494
    %v533 = vpack.c.b16 %v497, %v495
    %v534 = vpack.c.b16 %v500, %v498
    %v535 = vpack.c.b16 %v501, %v499
    %v536 = vpack.c.b16 %v504, %v502
    %v537 = vpack.c.b16 %v505, %v503
    %570 = vmatpush.bf16.msra.mxu0 %v520
    %571 = vmatpush.bf16.msra.mxu0 %v518
    %572 = vmatpush.bf16.msra.mxu0 %v516
    %573 = vmatpush.bf16.msra.mxu0 %v514
    %574 = vmatpush.bf16.msra.mxu0 %v512
    %575 = vmatpush.bf16.msra.mxu0 %v510
    %576 = vmatpush.bf16.msra.mxu0 %v508
    %577 = vmatpush.bf16.msra.mxu0 %v506
    %578 = vmatmul.bf16.gmra.mxu0 %v368
    %v579 = vpop.f32.mrf.mxu0
    %v580 = vadd.f32 %v406, %v579
    %v581 = vpop.f32.mrf.mxu0
    %582 = vdwg.mxu0
    %583 = vmatpush.bf16.msra.mxu0 %v536
    %584 = vmatpush.bf16.msra.mxu0 %v534
    %585 = vmatpush.bf16.msra.mxu0 %v532
    %586 = vmatpush.bf16.msra.mxu0 %v530
    %587 = vmatpush.bf16.msra.mxu0 %v528
    %588 = vmatpush.bf16.msra.mxu0 %v526
    %589 = vmatpush.bf16.msra.mxu0 %v524
    %590 = vmatpush.bf16.msra.mxu0 %v522
    %591 = vmatmul.bf16.gmra.mxu0 %v369
    %v592 = vpop.f32.mrf.mxu0
    %v593 = vadd.f32 %v580, %v592
    %v594 = vpop.f32.mrf.mxu0
    %595 = vdwg.mxu0
    %596 = vmatpush.bf16.msra.mxu0 %v521
    %597 = vmatpush.bf16.msra.mxu0 %v519
    %598 = vmatpush.bf16.msra.mxu0 %v517
    %599 = vmatpush.bf16.msra.mxu0 %v515
    %600 = vmatpush.bf16.msra.mxu0 %v513
    %601 = vmatpush.bf16.msra.mxu0 %v511
    %602 = vmatpush.bf16.msra.mxu0 %v509
    %603 = vmatpush.bf16.msra.mxu0 %v507
    %604 = vmatmul.bf16.gmra.mxu0 %v368
    %v605 = vpop.f32.mrf.mxu0
    %v606 = vadd.f32 %v407, %v605
    %v607 = vpop.f32.mrf.mxu0
    %608 = vdwg.mxu0
    %609 = vmatpush.bf16.msra.mxu0 %v537
    %610 = vmatpush.bf16.msra.mxu0 %v535
    %611 = vmatpush.bf16.msra.mxu0 %v533
    %612 = vmatpush.bf16.msra.mxu0 %v531
    %613 = vmatpush.bf16.msra.mxu0 %v529
    %614 = vmatpush.bf16.msra.mxu0 %v527
    %615 = vmatpush.bf16.msra.mxu0 %v525
    %616 = vmatpush.bf16.msra.mxu0 %v523
    %617 = vmatmul.bf16.gmra.mxu0 %v369
    %v618 = vpop.f32.mrf.mxu0
    %v619 = vadd.f32 %v606, %v618
    %v620 = vpop.f32.mrf.mxu0
    %621 = vdwg.mxu0
    %v622 = vmax.f32 %v593, 0.0
    %v623 = vmax.f32 %v619, 0.0
    %v624 = vadd.f32 %v622, %v366
    %v625 = vadd.f32 %v623, %v367
    %v626 = vpack.c.bf16 %v624, %v624
    %v627 = vpack.c.bf16 %v625, %v625
    %s628 = scalar_lea.vmem [#allocation2], 512
    %v629 = vld [vmem:[%s628] sm:$0xff]
    %v630 = vld [vmem:[%s628 + $0x8] sm:$0xff]
    %v631 = vld [vmem:[%s628 + $0x10] sm:$0xff]
    %v632 = vld [vmem:[%s628 + $0x18] sm:$0xff]
    %v633 = vld [vmem:[%s628 + $0x20] sm:$0xff]
    %v634 = vld [vmem:[%s628 + $0x28] sm:$0xff]
    %v635 = vld [vmem:[%s628 + $0x30] sm:$0xff]
    %v636 = vld [vmem:[%s628 + $0x38] sm:$0xff]
    %v637 = vld [vmem:[%s628 + $0x40] sm:$0xff]
    %v638 = vld [vmem:[%s628 + $0x48] sm:$0xff]
    %v639 = vld [vmem:[%s628 + $0x50] sm:$0xff]
    %v640 = vld [vmem:[%s628 + $0x58] sm:$0xff]
    %v641 = vld [vmem:[%s628 + $0x60] sm:$0xff]
    %v642 = vld [vmem:[%s628 + $0x68] sm:$0xff]
    %v643 = vld [vmem:[%s628 + $0x70] sm:$0xff]
    %v644 = vld [vmem:[%s628 + $0x78] sm:$0xff]
    %v645 = vld [vmem:[%s628 + $0x80] sm:$0xff]
    %v646 = vld [vmem:[%s628 + $0x88] sm:$0xff]
    %v647 = vld [vmem:[%s628 + $0x90] sm:$0xff]
    %v648 = vld [vmem:[%s628 + $0x98] sm:$0xff]
    %v649 = vld [vmem:[%s628 + $0xa0] sm:$0xff]
    %v650 = vld [vmem:[%s628 + $0xa8] sm:$0xff]
    %v651 = vld [vmem:[%s628 + $0xb0] sm:$0xff]
    %v652 = vld [vmem:[%s628 + $0xb8] sm:$0xff]
    %v653 = vld [vmem:[%s628 + $0xc0] sm:$0xff]
    %v654 = vld [vmem:[%s628 + $0xc8] sm:$0xff]
    %v655 = vld [vmem:[%s628 + $0xd0] sm:$0xff]
    %v656 = vld [vmem:[%s628 + $0xd8] sm:$0xff]
    %v657 = vld [vmem:[%s628 + $0xe0] sm:$0xff]
    %v658 = vld [vmem:[%s628 + $0xe8] sm:$0xff]
    %v659 = vld [vmem:[%s628 + $0xf0] sm:$0xff]
    %v660 = vld [vmem:[%s628 + $0xf8] sm:$0xff]
    %s661 = scalar_lea.vmem %s4, 4
    %v662 = vld [vmem:[%s661] sm:$0x3]
    %v664 = vperm.slane %v662, 0
    %v665 = vperm.slane %v662, 1
    %v700 = vunpack.c.l.b16 %v629
    %v701 = vunpack.c.h.b16 %v629
    %v702 = vunpack.c.l.b16 %v630
    %v703 = vunpack.c.h.b16 %v630
    %v704 = vunpack.c.l.b16 %v631
    %v705 = vunpack.c.h.b16 %v631
    %v706 = vunpack.c.l.b16 %v632
    %v707 = vunpack.c.h.b16 %v632
    %v708 = vunpack.c.l.b16 %v633
    %v709 = vunpack.c.h.b16 %v633
    %v710 = vunpack.c.l.b16 %v634
    %v711 = vunpack.c.h.b16 %v634
    %v712 = vunpack.c.l.b16 %v635
    %v713 = vunpack.c.h.b16 %v635
    %v714 = vunpack.c.l.b16 %v636
    %v715 = vunpack.c.h.b16 %v636
    %v716 = vunpack.c.l.b16 %v637
    %v717 = vunpack.c.h.b16 %v637
    %v718 = vunpack.c.l.b16 %v638
    %v719 = vunpack.c.h.b16 %v638
    %v720 = vunpack.c.l.b16 %v639
    %v721 = vunpack.c.h.b16 %v639
    %v722 = vunpack.c.l.b16 %v640
    %v723 = vunpack.c.h.b16 %v640
    %v724 = vunpack.c.l.b16 %v641
    %v725 = vunpack.c.h.b16 %v641
    %v726 = vunpack.c.l.b16 %v642
    %v727 = vunpack.c.h.b16 %v642
    %v728 = vunpack.c.l.b16 %v643
    %v729 = vunpack.c.h.b16 %v643
    %v730 = vunpack.c.l.b16 %v644
    %v731 = vunpack.c.h.b16 %v644
    %v732 = vunpack.c.l.b16 %v645
    %v733 = vunpack.c.h.b16 %v645
    %v734 = vunpack.c.l.b16 %v646
    %v735 = vunpack.c.h.b16 %v646
    %v736 = vunpack.c.l.b16 %v647
    %v737 = vunpack.c.h.b16 %v647
    %v738 = vunpack.c.l.b16 %v648
    %v739 = vunpack.c.h.b16 %v648
    %v740 = vunpack.c.l.b16 %v649
    %v741 = vunpack.c.h.b16 %v649
    %v742 = vunpack.c.l.b16 %v650
    %v743 = vunpack.c.h.b16 %v650
    %v744 = vunpack.c.l.b16 %v651
    %v745 = vunpack.c.h.b16 %v651
    %v746 = vunpack.c.l.b16 %v652
    %v747 = vunpack.c.h.b16 %v652
    %v748 = vunpack.c.l.b16 %v653
    %v749 = vunpack.c.h.b16 %v653
    %v750 = vunpack.c.l.b16 %v654
    %v751 = vunpack.c.h.b16 %v654
    %v752 = vunpack.c.l.b16 %v655
    %v753 = vunpack.c.h.b16 %v655
    %v754 = vunpack.c.l.b16 %v656
    %v755 = vunpack.c.h.b16 %v656
    %v756 = vunpack.c.l.b16 %v657
    %v757 = vunpack.c.h.b16 %v657
    %v758 = vunpack.c.l.b16 %v658
    %v759 = vunpack.c.h.b16 %v658
    %v760 = vunpack.c.l.b16 %v659
    %v761 = vunpack.c.h.b16 %v659
    %v762 = vunpack.c.l.b16 %v660
    %v763 = vunpack.c.h.b16 %v660
    %v764 = vpack.c.b16 %v702, %v700
    %v765 = vpack.c.b16 %v703, %v701
    %v766 = vpack.c.b16 %v706, %v704
    %v767 = vpack.c.b16 %v707, %v705
    %v768 = vpack.c.b16 %v710, %v708
    %v769 = vpack.c.b16 %v711, %v709
    %v770 = vpack.c.b16 %v714, %v712
    %v771 = vpack.c.b16 %v715, %v713
    %v772 = vpack.c.b16 %v718, %v716
    %v773 = vpack.c.b16 %v719, %v717
    %v774 = vpack.c.b16 %v722, %v720
    %v775 = vpack.c.b16 %v723, %v721
    %v776 = vpack.c.b16 %v726, %v724
    %v777 = vpack.c.b16 %v727, %v725
    %v778 = vpack.c.b16 %v730, %v728
    %v779 = vpack.c.b16 %v731, %v729
    %v780 = vpack.c.b16 %v734, %v732
    %v781 = vpack.c.b16 %v735, %v733
    %v782 = vpack.c.b16 %v738, %v736
    %v783 = vpack.c.b16 %v739, %v737
    %v784 = vpack.c.b16 %v742, %v740
    %v785 = vpack.c.b16 %v743, %v741
    %v786 = vpack.c.b16 %v746, %v744
    %v787 = vpack.c.b16 %v747, %v745
    %v788 = vpack.c.b16 %v750, %v748
    %v789 = vpack.c.b16 %v751, %v749
    %v790 = vpack.c.b16 %v754, %v752
    %v791 = vpack.c.b16 %v755, %v753
    %v792 = vpack.c.b16 %v758, %v756
    %v793 = vpack.c.b16 %v759, %v757
    %v794 = vpack.c.b16 %v762, %v760
    %v795 = vpack.c.b16 %v763, %v761
    %828 = vmatpush.bf16.msra.mxu0 %v778
    %829 = vmatpush.bf16.msra.mxu0 %v776
    %830 = vmatpush.bf16.msra.mxu0 %v774
    %831 = vmatpush.bf16.msra.mxu0 %v772
    %832 = vmatpush.bf16.msra.mxu0 %v770
    %833 = vmatpush.bf16.msra.mxu0 %v768
    %834 = vmatpush.bf16.msra.mxu0 %v766
    %835 = vmatpush.bf16.msra.mxu0 %v764
    %836 = vmatmul.bf16.gmra.mxu0 %v626
    %v837 = vpop.f32.mrf.mxu0
    %v838 = vadd.f32 %v664, %v837
    %v839 = vpop.f32.mrf.mxu0
    %840 = vdwg.mxu0
    %841 = vmatpush.bf16.msra.mxu0 %v794
    %842 = vmatpush.bf16.msra.mxu0 %v792
    %843 = vmatpush.bf16.msra.mxu0 %v790
    %844 = vmatpush.bf16.msra.mxu0 %v788
    %845 = vmatpush.bf16.msra.mxu0 %v786
    %846 = vmatpush.bf16.msra.mxu0 %v784
    %847 = vmatpush.bf16.msra.mxu0 %v782
    %848 = vmatpush.bf16.msra.mxu0 %v780
    %849 = vmatmul.bf16.gmra.mxu0 %v627
    %v850 = vpop.f32.mrf.mxu0
    %v851 = vadd.f32 %v838, %v850
    %v852 = vpop.f32.mrf.mxu0
    %853 = vdwg.mxu0
    %854 = vmatpush.bf16.msra.mxu0 %v779
    %855 = vmatpush.bf16.msra.mxu0 %v777
    %856 = vmatpush.bf16.msra.mxu0 %v775
    %857 = vmatpush.bf16.msra.mxu0 %v773
    %858 = vmatpush.bf16.msra.mxu0 %v771
    %859 = vmatpush.bf16.msra.mxu0 %v769
    %860 = vmatpush.bf16.msra.mxu0 %v767
    %861 = vmatpush.bf16.msra.mxu0 %v765
    %862 = vmatmul.bf16.gmra.mxu0 %v626
    %v863 = vpop.f32.mrf.mxu0
    %v864 = vadd.f32 %v665, %v863
    %v865 = vpop.f32.mrf.mxu0
    %866 = vdwg.mxu0
    %867 = vmatpush.bf16.msra.mxu0 %v795
    %868 = vmatpush.bf16.msra.mxu0 %v793
    %869 = vmatpush.bf16.msra.mxu0 %v791
    %870 = vmatpush.bf16.msra.mxu0 %v789
    %871 = vmatpush.bf16.msra.mxu0 %v787
    %872 = vmatpush.bf16.msra.mxu0 %v785
    %873 = vmatpush.bf16.msra.mxu0 %v783
    %874 = vmatpush.bf16.msra.mxu0 %v781
    %875 = vmatmul.bf16.gmra.mxu0 %v627
    %v876 = vpop.f32.mrf.mxu0
    %v877 = vadd.f32 %v864, %v876
    %v878 = vpop.f32.mrf.mxu0
    %879 = vdwg.mxu0
    %v880 = vmax.f32 %v851, 0.0
    %v881 = vmax.f32 %v877, 0.0
    %v882 = vadd.f32 %v880, %v624
    %v883 = vadd.f32 %v881, %v625
    %v884 = vpack.c.bf16 %v882, %v882
    %v885 = vpack.c.bf16 %v883, %v883
    %v886 = vld [vmem:[%s5] sm:$0xf]
    %v887 = vld [vmem:[%s5 + $0x4] sm:$0xf]
    %v888 = vld [vmem:[%s5 + $0x8] sm:$0xf]
    %v889 = vld [vmem:[%s5 + $0xc] sm:$0xf]
    %v890 = vld [vmem:[%s5 + $0x10] sm:$0xf]
    %v891 = vld [vmem:[%s5 + $0x14] sm:$0xf]
    %v892 = vld [vmem:[%s5 + $0x18] sm:$0xf]
    %v893 = vld [vmem:[%s5 + $0x1c] sm:$0xf]
    %v894 = vld [vmem:[%s5 + $0x20] sm:$0xf]
    %v895 = vld [vmem:[%s5 + $0x24] sm:$0xf]
    %v896 = vld [vmem:[%s5 + $0x28] sm:$0xf]
    %v897 = vld [vmem:[%s5 + $0x2c] sm:$0xf]
    %v898 = vld [vmem:[%s5 + $0x30] sm:$0xf]
    %v899 = vld [vmem:[%s5 + $0x34] sm:$0xf]
    %v900 = vld [vmem:[%s5 + $0x38] sm:$0xf]
    %v901 = vld [vmem:[%s5 + $0x3c] sm:$0xf]
    %v902 = vld [vmem:[%s5 + $0x40] sm:$0xf]
    %v903 = vld [vmem:[%s5 + $0x44] sm:$0xf]
    %v904 = vld [vmem:[%s5 + $0x48] sm:$0xf]
    %v905 = vld [vmem:[%s5 + $0x4c] sm:$0xf]
    %v906 = vld [vmem:[%s5 + $0x50] sm:$0xf]
    %v907 = vld [vmem:[%s5 + $0x54] sm:$0xf]
    %v908 = vld [vmem:[%s5 + $0x58] sm:$0xf]
    %v909 = vld [vmem:[%s5 + $0x5c] sm:$0xf]
    %v910 = vld [vmem:[%s5 + $0x60] sm:$0xf]
    %v911 = vld [vmem:[%s5 + $0x64] sm:$0xf]
    %v912 = vld [vmem:[%s5 + $0x68] sm:$0xf]
    %v913 = vld [vmem:[%s5 + $0x6c] sm:$0xf]
    %v914 = vld [vmem:[%s5 + $0x70] sm:$0xf]
    %v915 = vld [vmem:[%s5 + $0x74] sm:$0xf]
    %v916 = vld [vmem:[%s5 + $0x78] sm:$0xf]
    %v917 = vld [vmem:[%s5 + $0x7c] sm:$0xf]
    %v918 = vld [vmem:[%s6] sm:$0x1]
    %v920 = vperm.slane %v918, 0
    %v954 = vunpack.c.l.b16 %v886
    %v955 = vunpack.c.l.b16 %v887
    %v956 = vunpack.c.l.b16 %v888
    %v957 = vunpack.c.l.b16 %v889
    %v958 = vunpack.c.l.b16 %v890
    %v959 = vunpack.c.l.b16 %v891
    %v960 = vunpack.c.l.b16 %v892
    %v961 = vunpack.c.l.b16 %v893
    %v962 = vunpack.c.l.b16 %v894
    %v963 = vunpack.c.l.b16 %v895
    %v964 = vunpack.c.l.b16 %v896
    %v965 = vunpack.c.l.b16 %v897
    %v966 = vunpack.c.l.b16 %v898
    %v967 = vunpack.c.l.b16 %v899
    %v968 = vunpack.c.l.b16 %v900
    %v969 = vunpack.c.l.b16 %v901
    %v970 = vunpack.c.l.b16 %v902
    %v971 = vunpack.c.l.b16 %v903
    %v972 = vunpack.c.l.b16 %v904
    %v973 = vunpack.c.l.b16 %v905
    %v974 = vunpack.c.l.b16 %v906
    %v975 = vunpack.c.l.b16 %v907
    %v976 = vunpack.c.l.b16 %v908
    %v977 = vunpack.c.l.b16 %v909
    %v978 = vunpack.c.l.b16 %v910
    %v979 = vunpack.c.l.b16 %v911
    %v980 = vunpack.c.l.b16 %v912
    %v981 = vunpack.c.l.b16 %v913
    %v982 = vunpack.c.l.b16 %v914
    %v983 = vunpack.c.l.b16 %v915
    %v984 = vunpack.c.l.b16 %v916
    %v985 = vunpack.c.l.b16 %v917
    %v986 = vpack.c.b16 %v955, %v954
    %v987 = vpack.c.b16 %v957, %v956
    %v988 = vpack.c.b16 %v959, %v958
    %v989 = vpack.c.b16 %v961, %v960
    %v990 = vpack.c.b16 %v963, %v962
    %v991 = vpack.c.b16 %v965, %v964
    %v992 = vpack.c.b16 %v967, %v966
    %v993 = vpack.c.b16 %v969, %v968
    %v994 = vpack.c.b16 %v971, %v970
    %v995 = vpack.c.b16 %v973, %v972
    %v996 = vpack.c.b16 %v975, %v974
    %v997 = vpack.c.b16 %v977, %v976
    %v998 = vpack.c.b16 %v979, %v978
    %v999 = vpack.c.b16 %v981, %v980
    %v1000 = vpack.c.b16 %v983, %v982
    %v1001 = vpack.c.b16 %v985, %v984
    %1018 = vmatpush.bf16.msra.mxu0 %v993
    %1019 = vmatpush.bf16.msra.mxu0 %v992
    %1020 = vmatpush.bf16.msra.mxu0 %v991
    %1021 = vmatpush.bf16.msra.mxu0 %v990
    %1022 = vmatpush.bf16.msra.mxu0 %v989
    %1023 = vmatpush.bf16.msra.mxu0 %v988
    %1024 = vmatpush.bf16.msra.mxu0 %v987
    %1025 = vmatpush.bf16.msra.mxu0 %v986
    %1026 = vmatmul.bf16.gmra.mxu0 %v884
    %v1027 = vpop.f32.mrf.mxu0
    %v1028 = vadd.f32 %v920, %v1027
    %v1029 = vpop.f32.mrf.mxu0
    %1030 = vdwg.mxu0
    %1031 = vmatpush.bf16.msra.mxu0 %v1001
    %1032 = vmatpush.bf16.msra.mxu0 %v1000
    %1033 = vmatpush.bf16.msra.mxu0 %v999
    %1034 = vmatpush.bf16.msra.mxu0 %v998
    %1035 = vmatpush.bf16.msra.mxu0 %v997
    %1036 = vmatpush.bf16.msra.mxu0 %v996
    %1037 = vmatpush.bf16.msra.mxu0 %v995
    %1038 = vmatpush.bf16.msra.mxu0 %v994
    %1039 = vmatmul.bf16.gmra.mxu0 %v885
    %v1040 = vpop.f32.mrf.mxu0
    %v1041 = vadd.f32 %v1028, %v1040
    %v1042 = vpop.f32.mrf.mxu0
    %1043 = vdwg.mxu0
    %vm1044 = vcmask 64512
    %1045 = vst.msk [vmem:[%s9] sm:$0xff] %vm1044, %v1041
    %v1046 = vld [vmem:[%s7] sm:$0xf]
    %v1047 = vld [vmem:[%s7 + $0x4] sm:$0xf]
    %v1048 = vld [vmem:[%s7 + $0x8] sm:$0xf]
    %v1049 = vld [vmem:[%s7 + $0xc] sm:$0xf]
    %v1050 = vld [vmem:[%s7 + $0x10] sm:$0xf]
    %v1051 = vld [vmem:[%s7 + $0x14] sm:$0xf]
    %v1052 = vld [vmem:[%s7 + $0x18] sm:$0xf]
    %v1053 = vld [vmem:[%s7 + $0x1c] sm:$0xf]
    %v1054 = vld [vmem:[%s7 + $0x20] sm:$0xf]
    %v1055 = vld [vmem:[%s7 + $0x24] sm:$0xf]
    %v1056 = vld [vmem:[%s7 + $0x28] sm:$0xf]
    %v1057 = vld [vmem:[%s7 + $0x2c] sm:$0xf]
    %v1058 = vld [vmem:[%s7 + $0x30] sm:$0xf]
    %v1059 = vld [vmem:[%s7 + $0x34] sm:$0xf]
    %v1060 = vld [vmem:[%s7 + $0x38] sm:$0xf]
    %v1061 = vld [vmem:[%s7 + $0x3c] sm:$0xf]
    %v1062 = vld [vmem:[%s7 + $0x40] sm:$0xf]
    %v1063 = vld [vmem:[%s7 + $0x44] sm:$0xf]
    %v1064 = vld [vmem:[%s7 + $0x48] sm:$0xf]
    %v1065 = vld [vmem:[%s7 + $0x4c] sm:$0xf]
    %v1066 = vld [vmem:[%s7 + $0x50] sm:$0xf]
    %v1067 = vld [vmem:[%s7 + $0x54] sm:$0xf]
    %v1068 = vld [vmem:[%s7 + $0x58] sm:$0xf]
    %v1069 = vld [vmem:[%s7 + $0x5c] sm:$0xf]
    %v1070 = vld [vmem:[%s7 + $0x60] sm:$0xf]
    %v1071 = vld [vmem:[%s7 + $0x64] sm:$0xf]
    %v1072 = vld [vmem:[%s7 + $0x68] sm:$0xf]
    %v1073 = vld [vmem:[%s7 + $0x6c] sm:$0xf]
    %v1074 = vld [vmem:[%s7 + $0x70] sm:$0xf]
    %v1075 = vld [vmem:[%s7 + $0x74] sm:$0xf]
    %v1076 = vld [vmem:[%s7 + $0x78] sm:$0xf]
    %v1077 = vld [vmem:[%s7 + $0x7c] sm:$0xf]
    %v1078 = vld [vmem:[%s8] sm:$0x1]
    %v1080 = vperm.slane %v1078, 0
    %v1114 = vunpack.c.l.b16 %v1046
    %v1115 = vunpack.c.l.b16 %v1047
    %v1116 = vunpack.c.l.b16 %v1048
    %v1117 = vunpack.c.l.b16 %v1049
    %v1118 = vunpack.c.l.b16 %v1050
    %v1119 = vunpack.c.l.b16 %v1051
    %v1120 = vunpack.c.l.b16 %v1052
    %v1121 = vunpack.c.l.b16 %v1053
    %v1122 = vunpack.c.l.b16 %v1054
    %v1123 = vunpack.c.l.b16 %v1055
    %v1124 = vunpack.c.l.b16 %v1056
    %v1125 = vunpack.c.l.b16 %v1057
    %v1126 = vunpack.c.l.b16 %v1058
    %v1127 = vunpack.c.l.b16 %v1059
    %v1128 = vunpack.c.l.b16 %v1060
    %v1129 = vunpack.c.l.b16 %v1061
    %v1130 = vunpack.c.l.b16 %v1062
    %v1131 = vunpack.c.l.b16 %v1063
    %v1132 = vunpack.c.l.b16 %v1064
    %v1133 = vunpack.c.l.b16 %v1065
    %v1134 = vunpack.c.l.b16 %v1066
    %v1135 = vunpack.c.l.b16 %v1067
    %v1136 = vunpack.c.l.b16 %v1068
    %v1137 = vunpack.c.l.b16 %v1069
    %v1138 = vunpack.c.l.b16 %v1070
    %v1139 = vunpack.c.l.b16 %v1071
    %v1140 = vunpack.c.l.b16 %v1072
    %v1141 = vunpack.c.l.b16 %v1073
    %v1142 = vunpack.c.l.b16 %v1074
    %v1143 = vunpack.c.l.b16 %v1075
    %v1144 = vunpack.c.l.b16 %v1076
    %v1145 = vunpack.c.l.b16 %v1077
    %v1146 = vpack.c.b16 %v1115, %v1114
    %v1147 = vpack.c.b16 %v1117, %v1116
    %v1148 = vpack.c.b16 %v1119, %v1118
    %v1149 = vpack.c.b16 %v1121, %v1120
    %v1150 = vpack.c.b16 %v1123, %v1122
    %v1151 = vpack.c.b16 %v1125, %v1124
    %v1152 = vpack.c.b16 %v1127, %v1126
    %v1153 = vpack.c.b16 %v1129, %v1128
    %v1154 = vpack.c.b16 %v1131, %v1130
    %v1155 = vpack.c.b16 %v1133, %v1132
    %v1156 = vpack.c.b16 %v1135, %v1134
    %v1157 = vpack.c.b16 %v1137, %v1136
    %v1158 = vpack.c.b16 %v1139, %v1138
    %v1159 = vpack.c.b16 %v1141, %v1140
    %v1160 = vpack.c.b16 %v1143, %v1142
    %v1161 = vpack.c.b16 %v1145, %v1144
    %1178 = vmatpush.bf16.msra.mxu0 %v1153
    %1179 = vmatpush.bf16.msra.mxu0 %v1152
    %1180 = vmatpush.bf16.msra.mxu0 %v1151
    %1181 = vmatpush.bf16.msra.mxu0 %v1150
    %1182 = vmatpush.bf16.msra.mxu0 %v1149
    %1183 = vmatpush.bf16.msra.mxu0 %v1148
    %1184 = vmatpush.bf16.msra.mxu0 %v1147
    %1185 = vmatpush.bf16.msra.mxu0 %v1146
    %1186 = vmatmul.bf16.gmra.mxu0 %v884
    %v1187 = vpop.f32.mrf.mxu0
    %v1188 = vadd.f32 %v1080, %v1187
    %v1189 = vpop.f32.mrf.mxu0
    %1190 = vdwg.mxu0
    %1191 = vmatpush.bf16.msra.mxu0 %v1161
    %1192 = vmatpush.bf16.msra.mxu0 %v1160
    %1193 = vmatpush.bf16.msra.mxu0 %v1159
    %1194 = vmatpush.bf16.msra.mxu0 %v1158
    %1195 = vmatpush.bf16.msra.mxu0 %v1157
    %1196 = vmatpush.bf16.msra.mxu0 %v1156
    %1197 = vmatpush.bf16.msra.mxu0 %v1155
    %1198 = vmatpush.bf16.msra.mxu0 %v1154
    %1199 = vmatmul.bf16.gmra.mxu0 %v885
    %v1200 = vpop.f32.mrf.mxu0
    %v1201 = vadd.f32 %v1188, %v1200
    %v1202 = vpop.f32.mrf.mxu0
    %1203 = vdwg.mxu0
    %1204 = vst.msk [vmem:[%s10] sm:$0xff] %vm1044, %v1201
    // Predicated region
    $region42: #{cfview_forward.1} parent=1 // pred_check
      _
    $region43: #{cfview_forward.1} parent=1 // pred_check_branch
      %1206 = sbr.rel (0) target = $region45
    $region44: #{cfview_forward.1} parent=1 // pred_region
      _
    $region45: #{cfview_forward.1} parent=1 // pred_fallthru
      _
    // Predicated region
    $region46: #{cfview_forward.1} parent=1 // pred_check
      _
    $region47: #{cfview_forward.1} parent=1 // pred_check_branch
      %1208 = sbr.rel (0) target = $region49
    $region48: #{cfview_forward.1} parent=1 // pred_region
      _
    $region49: #{cfview_forward.1} parent=1 // pred_fallthru
      _
    // Predicated region
    $region50: #{cfview_forward.1} parent=1 // pred_check
      _
    $region51: #{cfview_forward.1} parent=1 // pred_check_branch
      %1210 = sbr.rel (0) target = $region53
    $region52: #{cfview_forward.1} parent=1 // pred_region
      _
    $region53: #{cfview_forward.1} parent=1 // pred_fallthru
      _
    // Predicated region
    $region54: #{cfview_forward.1} parent=1 // pred_check
      _
    $region55: #{cfview_forward.1} parent=1 // pred_check_branch
      %1212 = sbr.rel (0) target = $region57
    $region56: #{cfview_forward.1} parent=1 // pred_region
      _
    $region57: #{cfview_forward.1} parent=1 // pred_fallthru
      _
    %1213 = vsyncpa [#allocation3], 1

</llo_original>
